<compile_context>
chip_gen: v5e
topology: v5e:2x2
jax: 0.10.0
libtpu: 0.0.40
codegen_flags: <defaults>
</compile_context>

<pallas_src>
import functools

import jax
import jax.numpy as jnp
from jax.experimental import pallas as pl
from jax.experimental.pallas import tpu as pltpu

HIDDEN = 32      # fc1 / fc2 width of the PyTorch module
MAX_TB = 8192    # ~28 MiB VMEM footprint at 3.5 KB/row -> safe on v5e/v6e/v7x


def _round_up(n, m):
    return ((n + m - 1) // m) * m


def _cdiv(a, b):
    return -(-a // b)


# ---------------------------------------------------------------------------
# Kernel
# ---------------------------------------------------------------------------
def dueling_kernel(x_ref, w_ref, b_ref, out_ref, *, s_pad, n_action):
    x = x_ref[...]                                  # [TB, s_pad]
    w = w_ref[...]                                  # [s_pad + 256, 128]
    b = b_ref[...]                                  # [3, 128]

    # Static, sublane-aligned slices of the packed weight slab.
    w1 = w[0:s_pad, :]                              # [s_pad, 128] (cols 0:32 real)
    w2 = w[s_pad:s_pad + 128, :]                    # [128, 128]   (W2a|W2v in cols 0:64)
    w3 = w[s_pad + 128:s_pad + 256, :]              # [128, 128]   (dueling-folded fc3)

    # fc1 + relu (padded lanes 32..127 stay exactly zero).
    h = jnp.maximum(jnp.dot(x, w1, preferred_element_type=jnp.float32) + b[0:1, :], 0.0)

    # Fused fc2_adv / fc2_val + relu: cols 0:32 = adv branch, 32:64 = val branch.
    y2 = jnp.maximum(jnp.dot(h, w2, preferred_element_type=jnp.float32) + b[1:2, :], 0.0)

    # Fused fc3 with the dueling combine (val + adv - mean(adv)) folded into
    # the weights/bias at pack time: cols 0:n_action already hold the output.
    y3 = jnp.dot(y2, w3, preferred_element_type=jnp.float32) + b[2:3, :]

    out_ref[...] = y3[:, :n_action]


# ---------------------------------------------------------------------------
# Parameter packing (done once, outside the kernel)
# ---------------------------------------------------------------------------
def pack_params(params, n_state, n_action, hidden=HIDDEN):
    """Pack all Linear weights/biases into one weight slab + one bias block,
    folding the dueling combine into the fc3 weights/bias."""
    assert 2 * hidden <= 128 and n_action <= 128, "packing assumes width <= 128"
    s_pad = max(8, _round_up(n_state, 8))

    w = jnp.zeros((s_pad + 2 * 128, 128), jnp.float32)
    # fc1: [n_state, 32] -> rows 0:n_state, cols 0:32
    w = w.at[:n_state, :hidden].set(params["w1"])
    # fused fc2: W2a -> cols 0:32, W2v -> cols 32:64 (rows s_pad : s_pad+32)
    w = w.at[s_pad:s_pad + hidden, :hidden].set(params["w2a"])
    w = w.at[s_pad:s_pad + hidden, hidden:2 * hidden].set(params["w2v"])

    # fused fc3 with the dueling combine folded in:
    #   out[:, j] = a @ (W3a[:, j] - mean_k W3a[:, k]) + v @ W3v
    #               + (b3a[j] - mean(b3a) + b3v)
    w3a_centered = params["w3a"] - jnp.mean(params["w3a"], axis=1, keepdims=True)
    w3v_bcast = jnp.broadcast_to(params["w3v"], (hidden, n_action))
    r3 = s_pad + 128
    w = w.at[r3:r3 + hidden, :n_action].set(w3a_centered)          # adv rows
    w = w.at[r3 + hidden:r3 + 2 * hidden, :n_action].set(w3v_bcast)  # val rows

    b = jnp.zeros((3, 128), jnp.float32)
    b = b.at[0, :hidden].set(params["b1"][0])
    b = b.at[1, :hidden].set(params["b2a"][0])
    b = b.at[1, hidden:2 * hidden].set(params["b2v"][0])
    b3_folded = params["b3a"][0] - jnp.mean(params["b3a"][0]) + params["b3v"][0, 0]
    b = b.at[2, :n_action].set(b3_folded)

    return w, b, s_pad


# ---------------------------------------------------------------------------
# Wrapper
# ---------------------------------------------------------------------------
def dueling_forward(x, w_slab, b_slab, *, n_state, n_action, s_pad,
                    block_b=2048, min_split_rows=1024):
    """x: [B, n_state] float32 -> [B, n_action] float32."""
    B = x.shape[0]
    block_b = min(_round_up(block_b, 8), MAX_TB)

    # Tile selection: minimize batch padding, and give v7x megacore >= 2 grid
    # steps for moderate/large batches (each step still >= ~512 rows).
    n_tiles = max(1, _cdiv(B, block_b))
    if n_tiles == 1 and B >= min_split_rows:
        n_tiles = 2
    tb = min(_round_up(max(_cdiv(B, n_tiles), 1), 8), block_b)
    b_pad = _round_up(B, tb)

    x = x.astype(jnp.float32)
    if b_pad != B or s_pad != n_state:
        x_in = jnp.pad(x, ((0, b_pad - B), (0, s_pad - n_state)))
    else:
        x_in = x  # no wrapper-side HBM round-trip when shapes already conform

    # VMEM budget: lane-padded double-buffered x/out (~4 * tb * 512 B) plus
    # ~3 f32 [tb, 128] intermediates, plus the resident weight/bias blocks.
    vmem_est = 7 * tb * 128 * 4 + 2 * (s_pad + 256) * 128 * 4 + 2 * 8 * 128 * 4
    vmem_limit = int(min(48 * 1024 * 1024, max(2 * vmem_est, 16 * 1024 * 1024)))

    kernel = functools.partial(dueling_kernel, s_pad=s_pad, n_action=n_action)
    out = pl.pallas_call(
        kernel,
        out_shape=jax.ShapeDtypeStruct((b_pad, n_action), jnp.float32),
        grid=(b_pad // tb,),
        in_specs=[
            pl.BlockSpec((tb, s_pad), lambda i: (i, 0)),            # x: tiled over batch
            pl.BlockSpec((s_pad + 256, 128), lambda i: (0, 0)),     # weights: VMEM-resident
            pl.BlockSpec((3, 128), lambda i: (0, 0)),               # biases:  VMEM-resident
        ],
        out_specs=pl.BlockSpec((tb, n_action), lambda i: (i, 0)),
        compiler_params=pltpu.CompilerParams(
            dimension_semantics=("parallel",),
            vmem_limit_bytes=vmem_limit,
        ),
    )(x_in, w_slab, b_slab)
    return out[:B] if b_pad != B else out


# ---------------------------------------------------------------------------
# Init + pure-JAX reference
# ---------------------------------------------------------------------------
def init_params(key, n_state, n_action, hidden=HIDDEN):
    """nn.Linear-style uniform(-1/sqrt(fan_in), +1/sqrt(fan_in)) init.
    Weights stored transposed ([in, out]); biases as [1, out] rows."""
    def linear(k, fan_in, fan_out):
        kw, kb = jax.random.split(k)
        bound = 1.0 / jnp.sqrt(float(fan_in))
        wt = jax.random.uniform(kw, (fan_in, fan_out), jnp.float32, -bound, bound)
        bs = jax.random.uniform(kb, (1, fan_out), jnp.float32, -bound, bound)
        return wt, bs

    k1, k2a, k3a, k2v, k3v = jax.random.split(key, 5)
    w1, b1 = linear(k1, n_state, hidden)
    w2a, b2a = linear(k2a, hidden, hidden)
    w3a, b3a = linear(k3a, hidden, n_action)
    w2v, b2v = linear(k2v, hidden, hidden)
    w3v, b3v = linear(k3v, hidden, 1)
    return dict(w1=w1, b1=b1,
                w2a=w2a, b2a=b2a, w3a=w3a, b3a=b3a,
                w2v=w2v, b2v=b2v, w3v=w3v, b3v=b3v)


def reference_forward(x, p):
    h = jnp.maximum(x @ p["w1"] + p["b1"], 0.0)
    a = jnp.maximum(h @ p["w2a"] + p["b2a"], 0.0)
    adv = a @ p["w3a"] + p["b3a"]
    v = jnp.maximum(h @ p["w2v"] + p["b2v"], 0.0)
    val = v @ p["w3v"] + p["b3v"]
    return val + adv - jnp.mean(adv, axis=1, keepdims=True)


# ---------------------------------------------------------------------------
# Main
# ---------------------------------------------------------------------------
if __name__ == "__main__":
    B, N_STATE, N_ACTION = 2, 8, 4

    key = jax.random.PRNGKey(0)
    k_params, k_x, k_x2, k_x3 = jax.random.split(key, 4)
    params = init_params(k_params, N_STATE, N_ACTION)
    w_slab, b_slab, s_pad = pack_params(params, N_STATE, N_ACTION)

    # Small batch (B=2): padded to 8 sublanes, single grid step.
    x = jax.random.normal(k_x, (B, N_STATE), dtype=jnp.float32)
    out = jax.block_until_ready(
        dueling_forward(x, w_slab, b_slab,
                        n_state=N_STATE, n_action=N_ACTION, s_pad=s_pad))
    ref = reference_forward(x, params)
    assert out.shape == (B, N_ACTION)
    assert jnp.allclose(out, ref, atol=1e-5, rtol=1e-5), "mismatch vs reference (B=2)"

    # Ragged batch check (exercises batch padding path).
    B2 = 37
    x2 = jax.random.normal(k_x2, (B2, N_STATE), dtype=jnp.float32)
    out2 = jax.block_until_ready(
        dueling_forward(x2, w_slab, b_slab,
                        n_state=N_STATE, n_action=N_ACTION, s_pad=s_pad))
    ref2 = reference_forward(x2, params)
    assert out2.shape == (B2, N_ACTION)
    assert jnp.allclose(out2, ref2, atol=1e-5, rtol=1e-5), "mismatch vs reference (B=37)"

    # Larger batch check (exercises multi-step grid + megacore split + padding).
    B3 = 2500
    x3 = jax.random.normal(k_x3, (B3, N_STATE), dtype=jnp.float32)
    out3 = jax.block_until_ready(
        dueling_forward(x3, w_slab, b_slab,
                        n_state=N_STATE, n_action=N_ACTION, s_pad=s_pad))
    ref3 = reference_forward(x3, params)
    assert out3.shape == (B3, N_ACTION)
    assert jnp.allclose(out3, ref3, atol=1e-5, rtol=1e-5), "mismatch vs reference (B=2500)"

    print("KERNEL_OK")
</pallas_src>

<mosaic_0001>
module attributes {stable_mosaic.version = 11 : i64} {
  func.func @dueling_kernel(%arg0: i32, %arg1: memref<8x8xf32, #tpu.memory_space<vmem>>, %arg2: memref<264x128xf32, #tpu.memory_space<vmem>>, %arg3: memref<3x128xf32, #tpu.memory_space<vmem>>, %arg4: memref<8x4xf32, #tpu.memory_space<vmem>>) attributes {dimension_semantics = [#tpu.dimension_semantics<parallel>], iteration_bounds = array<i64: 1>, scalar_prefetch = 0 : i64, scratch_operands = 0 : i64, tpu.core_type = #tpu.core_type<tc>, window_params = [{transform_indices = @transform_0, window_bounds = array<i64: 8, 8>}, {pipeline_mode = #tpu.pipeline_mode<synchronous>, transform_indices = @transform_1, window_bounds = array<i64: 264, 128>}, {pipeline_mode = #tpu.pipeline_mode<synchronous>, transform_indices = @transform_2, window_bounds = array<i64: 3, 128>}, {transform_indices = @transform_3, window_bounds = array<i64: 8, 4>}]} {
    %c0 = arith.constant 0 : index
    %c0_0 = arith.constant 0 : index
    %0 = vector.load %arg1[%c0, %c0_0] : memref<8x8xf32, #tpu.memory_space<vmem>>, vector<8x8xf32>
    %c0_1 = arith.constant 0 : index
    %c0_2 = arith.constant 0 : index
    %1 = vector.load %arg2[%c0_1, %c0_2] : memref<264x128xf32, #tpu.memory_space<vmem>>, vector<264x128xf32>
    %c0_3 = arith.constant 0 : index
    %c0_4 = arith.constant 0 : index
    %2 = vector.load %arg3[%c0_3, %c0_4] : memref<3x128xf32, #tpu.memory_space<vmem>>, vector<3x128xf32>
    %3 = vector.extract_strided_slice %1 {offsets = [0, 0], sizes = [8, 128], strides = [1, 1]} : vector<264x128xf32> to vector<8x128xf32>
    %4 = vector.extract_strided_slice %1 {offsets = [8, 0], sizes = [128, 128], strides = [1, 1]} : vector<264x128xf32> to vector<128x128xf32>
    %5 = vector.extract_strided_slice %1 {offsets = [136, 0], sizes = [128, 128], strides = [1, 1]} : vector<264x128xf32> to vector<128x128xf32>
    %cst = arith.constant dense<0.000000e+00> : vector<8x128xf32>
    %6 = tpu.matmul %0, %3, %cst {dimension_numbers = #tpu.dot_dimension_numbers<[1], [0], [0], [1], [0, 0, 1, 1], [], []>} : vector<8x8xf32>, vector<8x128xf32>, vector<8x128xf32> -> vector<8x128xf32>
    %7 = vector.extract_strided_slice %2 {offsets = [0, 0], sizes = [1, 128], strides = [1, 1]} : vector<3x128xf32> to vector<1x128xf32>
    %8 = vector.broadcast %7 : vector<1x128xf32> to vector<8x128xf32>
    %9 = arith.addf %6, %8 : vector<8x128xf32>
    %cst_5 = arith.constant 0.000000e+00 : f32
    %10 = vector.broadcast %cst_5 : f32 to vector<8x128xf32>
    %11 = arith.maximumf %9, %10 : vector<8x128xf32>
    %cst_6 = arith.constant dense<0.000000e+00> : vector<8x128xf32>
    %12 = tpu.matmul %11, %4, %cst_6 {dimension_numbers = #tpu.dot_dimension_numbers<[1], [0], [0], [1], [0, 0, 1, 1], [], []>} : vector<8x128xf32>, vector<128x128xf32>, vector<8x128xf32> -> vector<8x128xf32>
    %13 = vector.extract_strided_slice %2 {offsets = [1, 0], sizes = [1, 128], strides = [1, 1]} : vector<3x128xf32> to vector<1x128xf32>
    %14 = vector.broadcast %13 : vector<1x128xf32> to vector<8x128xf32>
    %15 = arith.addf %12, %14 : vector<8x128xf32>
    %cst_7 = arith.constant 0.000000e+00 : f32
    %16 = vector.broadcast %cst_7 : f32 to vector<8x128xf32>
    %17 = arith.maximumf %15, %16 : vector<8x128xf32>
    %cst_8 = arith.constant dense<0.000000e+00> : vector<8x128xf32>
    %18 = tpu.matmul %17, %5, %cst_8 {dimension_numbers = #tpu.dot_dimension_numbers<[1], [0], [0], [1], [0, 0, 1, 1], [], []>} : vector<8x128xf32>, vector<128x128xf32>, vector<8x128xf32> -> vector<8x128xf32>
    %19 = vector.extract_strided_slice %2 {offsets = [2, 0], sizes = [1, 128], strides = [1, 1]} : vector<3x128xf32> to vector<1x128xf32>
    %20 = vector.broadcast %19 : vector<1x128xf32> to vector<8x128xf32>
    %21 = arith.addf %18, %20 : vector<8x128xf32>
    %22 = vector.extract_strided_slice %21 {offsets = [0, 0], sizes = [8, 4], strides = [1, 1]} : vector<8x128xf32> to vector<8x4xf32>
    %c0_9 = arith.constant 0 : index
    %c0_10 = arith.constant 0 : index
    %23 = vector.load %arg4[%c0_9, %c0_10] : memref<8x4xf32, #tpu.memory_space<vmem>>, vector<8x4xf32>
    tpu.vector_store %arg4[%c0_9, %c0_10], %22 {strides = array<i32>} : memref<8x4xf32, #tpu.memory_space<vmem>>, vector<8x4xf32>,
    return
  }
  func.func @transform_0(%arg0: i32) -> (i32, i32) {
    %c0_i32 = arith.constant 0 : i32
    %c0_i32_0 = arith.constant 0 : i32
    return %arg0, %c0_i32 : i32, i32
  }
  func.func @transform_1(%arg0: i32) -> (i32, i32) {
    %c0_i32 = arith.constant 0 : i32
    %c0_i32_0 = arith.constant 0 : i32
    %c0_i32_1 = arith.constant 0 : i32
    return %c0_i32, %c0_i32_0 : i32, i32
  }
  func.func @transform_2(%arg0: i32) -> (i32, i32) {
    %c0_i32 = arith.constant 0 : i32
    %c0_i32_0 = arith.constant 0 : i32
    %c0_i32_1 = arith.constant 0 : i32
    return %c0_i32, %c0_i32_0 : i32, i32
  }
  func.func @transform_3(%arg0: i32) -> (i32, i32) {
    %c0_i32 = arith.constant 0 : i32
    %c0_i32_0 = arith.constant 0 : i32
    return %arg0, %c0_i32 : i32, i32
  }
}

</mosaic_0001>

<llo_original>
// kernel: tpu_custom_call.1
$region0: #{tpu_custom_call.1}
  #allocation0 [shape = 'u32[]', space=smem, size = 0x4, offset = 0x4, fixed_abs, tag = 'smem constant byte address 0x4 - core index']
  #allocation1 [shape = 'u32[72,128]{1,0:T(1,128)}', space=vmem, size = 0x9000, scoped, tag = 'internal scratch']
  %s0 = inlined_call_operand.hbm [shape: f32[8,8], index: 0, kind: input, shape index: {}]
  %s1 = inlined_call_operand.hbm [shape: f32[264,128], index: 1, kind: input, shape index: {}]
  %s2 = inlined_call_operand.hbm [shape: f32[3,128], index: 2, kind: input, shape index: {}]
  %s3 = inlined_call_operand.vmem [shape: f32[8,4], index: 3, kind: output, shape index: {}]
  %s4 = sld [smem:[#allocation0]]
  $region34: #{tpu_custom_call.1} parent=0
    _
  %s6 = ssub.s32 1, %s4
  %s7 = scalar_select 0, %s6, %s4
  $region1: #{tpu_custom_call.1} parent=0
    #allocation2 [shape = 'u8[4096]{0}', space=vmem, size = 0x1000, scoped, tag = 'input window, operand 0, single buffered']
    #allocation3 [shape = 's32[1]{0}', space=sflag, size = 0x4, scoped, tag = 'scoped memory for tpu_custom_call.1']
    #allocation4 [shape = 'u8[135168]{0}', space=vmem, size = 0x21000, scoped, tag = 'input window, operand 1, single buffered']
    #allocation5 [shape = 's32[1]{0}', space=sflag, size = 0x4, scoped, tag = 'scoped memory for tpu_custom_call.1']
    #allocation6 [shape = 'u8[2048]{0}', space=vmem, size = 0x800, scoped, tag = 'input window, operand 2, single buffered']
    %8 = vsyncpa [#allocation3], 0
    %9 = vsyncpa [#allocation5], 0
    // Predicated region
    $region2: #{tpu_custom_call.1} parent=1 // pred_check
      _
    $region3: #{tpu_custom_call.1} parent=1 // pred_check_branch
      %11 = sbr.rel (0) target = $region5
    $region4: #{tpu_custom_call.1} parent=1 // pred_region
      %13 = vsyncadd [#allocation3], 0
      %s15 = sshll.u32 %s0, 4
      %s16 = int_to_ptr.hbm [resolvable:$true] %s15
      %s17 = sshll.u32 [#allocation2], 4
      %s18 = int_to_ptr.vmem [resolvable:$true] %s17
      %20 = dma.hbm_to_vmem [thread:$0]  %s16, 128, %s18, [#allocation3]
    $region5: #{tpu_custom_call.1} parent=1 // pred_fallthru
      _
    // Predicated region
    $region6: #{tpu_custom_call.1} parent=1 // pred_check
      _
    $region7: #{tpu_custom_call.1} parent=1 // pred_check_branch
      %22 = sbr.rel (0) target = $region9
    $region8: #{tpu_custom_call.1} parent=1 // pred_region
      %24 = vsyncadd [#allocation5], 0
      %s25 = sshll.u32 %s1, 4
      %s26 = int_to_ptr.hbm [resolvable:$true] %s25
      %s27 = sshll.u32 [#allocation4], 4
      %s28 = int_to_ptr.vmem [resolvable:$true] %s27
      %33 = dma.hbm_to_vmem [thread:$0]  %s26, 4224, %s28, [#allocation5], 128, 128, 8
    $region9: #{tpu_custom_call.1} parent=1 // pred_fallthru
      _
    // Predicated region
    $region10: #{tpu_custom_call.1} parent=1 // pred_check
      _
    $region11: #{tpu_custom_call.1} parent=1 // pred_check_branch
      %35 = sbr.rel (0) target = $region13
    $region12: #{tpu_custom_call.1} parent=1 // pred_region
      %37 = vsyncadd [#allocation5], 0
      %s39 = sshll.u32 %s2, 4
      %s40 = int_to_ptr.hbm [resolvable:$true] %s39
      %s41 = sshll.u32 [#allocation6], 4
      %s42 = int_to_ptr.vmem [resolvable:$true] %s41
      %44 = dma.hbm_to_vmem [thread:$0]  %s40, 64, %s42, [#allocation5]
    $region13: #{tpu_custom_call.1} parent=1 // pred_fallthru
      _
    // Predicated region
    $region14: #{tpu_custom_call.1} parent=1 // pred_check
      _
    $region15: #{tpu_custom_call.1} parent=1 // pred_check_branch
      %46 = sbr.rel (0) target = $region17
    $region16: #{tpu_custom_call.1} parent=1 // pred_region
      %48 = dma.done [#allocation3], 128
    $region17: #{tpu_custom_call.1} parent=1 // pred_fallthru
      _
    // Predicated region
    $region18: #{tpu_custom_call.1} parent=1 // pred_check
      _
    $region19: #{tpu_custom_call.1} parent=1 // pred_check_branch
      %50 = sbr.rel (0) target = $region21
    $region20: #{tpu_custom_call.1} parent=1 // pred_region
      %52 = dma.done [#allocation5], 4224
    $region21: #{tpu_custom_call.1} parent=1 // pred_fallthru
      _
    // Predicated region
    $region22: #{tpu_custom_call.1} parent=1 // pred_check
      _
    $region23: #{tpu_custom_call.1} parent=1 // pred_check_branch
      %54 = sbr.rel (0) target = $region25
    $region24: #{tpu_custom_call.1} parent=1 // pred_region
      %56 = dma.done [#allocation5], 64
    $region25: #{tpu_custom_call.1} parent=1 // pred_fallthru
      _
    %v57 = vld [vmem:[#allocation2] sm:$0xff]
    %v58 = vld [vmem:[#allocation4] sm:$0xff]
    %v59 = vld [vmem:[#allocation4 + $0x8] sm:$0xff]
    %v60 = vld [vmem:[#allocation4 + $0x10] sm:$0xff]
    %v61 = vld [vmem:[#allocation4 + $0x18] sm:$0xff]
    %v62 = vld [vmem:[#allocation4 + $0x20] sm:$0xff]
    %v63 = vld [vmem:[#allocation4 + $0x28] sm:$0xff]
    %v64 = vld [vmem:[#allocation4 + $0x30] sm:$0xff]
    %v65 = vld [vmem:[#allocation4 + $0x38] sm:$0xff]
    %v66 = vld [vmem:[#allocation4 + $0x40] sm:$0xff]
    %v67 = vld [vmem:[#allocation4 + $0x48] sm:$0xff]
    %v68 = vld [vmem:[#allocation4 + $0x50] sm:$0xff]
    %v69 = vld [vmem:[#allocation4 + $0x58] sm:$0xff]
    %v70 = vld [vmem:[#allocation4 + $0x60] sm:$0xff]
    %v71 = vld [vmem:[#allocation4 + $0x68] sm:$0xff]
    %v72 = vld [vmem:[#allocation4 + $0x70] sm:$0xff]
    %v73 = vld [vmem:[#allocation4 + $0x78] sm:$0xff]
    %v74 = vld [vmem:[#allocation4 + $0x80] sm:$0xff]
    %v75 = vld [vmem:[#allocation4 + $0x88] sm:$0xff]
    %v76 = vld [vmem:[#allocation4 + $0x90] sm:$0xff]
    %v77 = vld [vmem:[#allocation4 + $0x98] sm:$0xff]
    %v78 = vld [vmem:[#allocation4 + $0xa0] sm:$0xff]
    %v79 = vld [vmem:[#allocation4 + $0xa8] sm:$0xff]
    %v80 = vld [vmem:[#allocation4 + $0xb0] sm:$0xff]
    %v81 = vld [vmem:[#allocation4 + $0xb8] sm:$0xff]
    %v82 = vld [vmem:[#allocation4 + $0xc0] sm:$0xff]
    %v83 = vld [vmem:[#allocation4 + $0xc8] sm:$0xff]
    %v84 = vld [vmem:[#allocation4 + $0xd0] sm:$0xff]
    %v85 = vld [vmem:[#allocation4 + $0xd8] sm:$0xff]
    %v86 = vld [vmem:[#allocation4 + $0xe0] sm:$0xff]
    %v87 = vld [vmem:[#allocation4 + $0xe8] sm:$0xff]
    %v88 = vld [vmem:[#allocation4 + $0xf0] sm:$0xff]
    %v89 = vld [vmem:[#allocation4 + $0xf8] sm:$0xff]
    %v90 = vld [vmem:[#allocation4 + $0x100] sm:$0xff]
    %v91 = vld [vmem:[#allocation6] sm:$0x7]
    %v92 = vperm.slane %v91, 0
    %vm93 = vcmask 64512
    %v95 = vsel %vm93, %v57, 0
    %97 = vmatpush.msra.mxu0 0.0
    %98 = vmatpush.msra.mxu0 0.0
    %99 = vmatpush.msra.mxu0 0.0
    %100 = vmatpush.msra.mxu0 0.0
    %101 = vmatpush.msra.mxu0 0.0
    %102 = vmatpush.msra.mxu0 0.0
    %103 = vmatpush.msra.mxu0 0.0
    %104 = vmatpush.msra.mxu0 0.0
    %105 = vmatpush.msra.mxu0 0.0
    %106 = vmatpush.msra.mxu0 0.0
    %107 = vmatpush.msra.mxu0 0.0
    %108 = vmatpush.msra.mxu0 0.0
    %109 = vmatpush.msra.mxu0 0.0
    %110 = vmatpush.msra.mxu0 0.0
    %111 = vmatpush.msra.mxu0 0.0
    %112 = vmatpush.msra.mxu0 %v58
    %113 = vmatmul.f32.gmra.mxu0 %v95
    %v114 = vpop.f32.mrf.mxu0
    %v115 = vadd.f32 %v92, %v114
    %116 = vdwg.mxu0
    %v117 = vmax.f32 %v115, 0.0
    %v118 = vperm.slane %v91, 1
    %119 = vmatpush.msra.mxu0 %v74
    %120 = vmatpush.msra.mxu0 %v73
    %121 = vmatpush.msra.mxu0 %v72
    %122 = vmatpush.msra.mxu0 %v71
    %123 = vmatpush.msra.mxu0 %v70
    %124 = vmatpush.msra.mxu0 %v69
    %125 = vmatpush.msra.mxu0 %v68
    %126 = vmatpush.msra.mxu0 %v67
    %127 = vmatpush.msra.mxu0 %v66
    %128 = vmatpush.msra.mxu0 %v65
    %129 = vmatpush.msra.mxu0 %v64
    %130 = vmatpush.msra.mxu0 %v63
    %131 = vmatpush.msra.mxu0 %v62
    %132 = vmatpush.msra.mxu0 %v61
    %133 = vmatpush.msra.mxu0 %v60
    %134 = vmatpush.msra.mxu0 %v59
    %135 = vmatmul.f32.gmra.mxu0 %v117
    %v136 = vpop.f32.mrf.mxu0
    %v137 = vadd.f32 %v118, %v136
    %138 = vdwg.mxu0
    %v139 = vmax.f32 %v137, 0.0
    %v140 = vperm.slane %v91, 2
    %141 = vmatpush.msra.mxu0 %v90
    %142 = vmatpush.msra.mxu0 %v89
    %143 = vmatpush.msra.mxu0 %v88
    %144 = vmatpush.msra.mxu0 %v87
    %145 = vmatpush.msra.mxu0 %v86
    %146 = vmatpush.msra.mxu0 %v85
    %147 = vmatpush.msra.mxu0 %v84
    %148 = vmatpush.msra.mxu0 %v83
    %149 = vmatpush.msra.mxu0 %v82
    %150 = vmatpush.msra.mxu0 %v81
    %151 = vmatpush.msra.mxu0 %v80
    %152 = vmatpush.msra.mxu0 %v79
    %153 = vmatpush.msra.mxu0 %v78
    %154 = vmatpush.msra.mxu0 %v77
    %155 = vmatpush.msra.mxu0 %v76
    %156 = vmatpush.msra.mxu0 %v75
    %157 = vmatmul.f32.gmra.mxu0 %v139
    %v158 = vpop.f32.mrf.mxu0
    %v159 = vadd.f32 %v140, %v158
    %160 = vdwg.mxu0
    %vm161 = vcmask 31744
    %162 = vst.msk [vmem:[%s3] sm:$0xff] %vm161, %v159
    // Predicated region
    $region26: #{tpu_custom_call.1} parent=1 // pred_check
      _
    $region27: #{tpu_custom_call.1} parent=1 // pred_check_branch
      %164 = sbr.rel (0) target = $region29
    $region28: #{tpu_custom_call.1} parent=1 // pred_region
      _
    $region29: #{tpu_custom_call.1} parent=1 // pred_fallthru
      _
    // Predicated region
    $region30: #{tpu_custom_call.1} parent=1 // pred_check
      _
    $region31: #{tpu_custom_call.1} parent=1 // pred_check_branch
      %166 = sbr.rel (0) target = $region33
    $region32: #{tpu_custom_call.1} parent=1 // pred_region
      _
    $region33: #{tpu_custom_call.1} parent=1 // pred_fallthru
      _
    %167 = vsyncpa [#allocation3], 1
    %168 = vsyncpa [#allocation5], 1

</llo_original>
